<compile_context>
chip_gen: v7x
topology: tpu7x:2x2x1
jax: 0.10.0
libtpu: 0.0.40
codegen_flags: <defaults>
</compile_context>

<pallas_src>
import jax
import jax.numpy as jnp
from jax.experimental import pallas as pl
from jax.experimental.pallas import tpu as pltpu


# ---------------------------------------------------------------------------
# Parameter slab layout (rows x 128 lanes, all region starts 16-row aligned for
# bf16 packing). Every weight is zero-padded to 128 output columns and the K
# dimension of the next layer is zero-padded to match, so the fused math needs
# no lane slicing and the padded output columns are exact zeros.
# ---------------------------------------------------------------------------
_W1_ROW, _B1_ROW = 0, 16          # W1: [0:10, 0:64],  b1: row 16,  cols 0:64
_W2_ROW, _B2_ROW = 32, 160        # W2: [32:96, 0:32], b2: row 160, cols 0:32
_W3_ROW, _B3_ROW = 176, 304       # W3: [176:208,0:3], b3: row 304, cols 0:3
_SLAB_ROWS = 320
_X_PAD = 16                       # input features 10 padded to 16


def _round_up(a, m):
    return ((a + m - 1) // m) * m


def mlp_kernel(x_ref, slab_ref, out_ref):
    f32 = jnp.float32
    bf16 = jnp.bfloat16

    x = x_ref[...]                                   # [TB, 16]  bf16 (cols 10:16 zero)

    w1 = slab_ref[_W1_ROW:_W1_ROW + 16, :]           # [16, 128] bf16
    b1 = slab_ref[_B1_ROW:_B1_ROW + 1, :].astype(f32)
    w2 = slab_ref[_W2_ROW:_W2_ROW + 128, :]          # [128, 128] bf16
    b2 = slab_ref[_B2_ROW:_B2_ROW + 1, :].astype(f32)
    w3 = slab_ref[_W3_ROW:_W3_ROW + 128, :]          # [128, 128] bf16
    b3 = slab_ref[_B3_ROW:_B3_ROW + 1, :].astype(f32)

    # Layer 1: Linear(10 -> 64) + ReLU  (padded to 128 output lanes; pad lanes stay 0)
    h1 = jnp.dot(x, w1, preferred_element_type=f32) + b1
    h1 = jnp.maximum(h1, 0.0).astype(bf16)

    # Layer 2: Linear(64 -> 32) + ReLU
    h2 = jnp.dot(h1, w2, preferred_element_type=f32) + b2
    h2 = jnp.maximum(h2, 0.0).astype(bf16)

    # Layer 3: Linear(32 -> 3)  (cols 3:128 of the result are exact zeros)
    h3 = jnp.dot(h2, w3, preferred_element_type=f32) + b3

    out_ref[...] = h3.astype(out_ref.dtype)          # lane-dense [TB, 128] store


def pack_params(params):
    """Pack (w1,b1,w2,b2,w3,b3) with [in,out] weights into one bf16 [320,128] slab."""
    w1, b1, w2, b2, w3, b3 = params
    slab = jnp.zeros((_SLAB_ROWS, 128), jnp.float32)
    slab = slab.at[_W1_ROW:_W1_ROW + 10, 0:64].set(w1)
    slab = slab.at[_B1_ROW, 0:64].set(b1)
    slab = slab.at[_W2_ROW:_W2_ROW + 64, 0:32].set(w2)
    slab = slab.at[_B2_ROW, 0:32].set(b2)
    slab = slab.at[_W3_ROW:_W3_ROW + 32, 0:3].set(w3)
    slab = slab.at[_B3_ROW, 0:3].set(b3)
    return slab.astype(jnp.bfloat16)


def ai_fork_brain_forward(x, params, *, tb=512):
    """x: [B, 10] float32 -> [B, 3] float32 (same semantics as the PyTorch module)."""
    B = x.shape[0]

    # Batch tile: bf16 needs 16-row alignment; pad B to a whole number of tiles.
    tb_eff = min(tb, _round_up(B, 16))
    b_pad = _round_up(B, tb_eff)
    grid = (b_pad // tb_eff,)

    # Pad features 10 -> 16 and rows B -> b_pad, cast to bf16 (pad region is zero).
    x16 = jnp.zeros((b_pad, _X_PAD), jnp.bfloat16).at[:B, :10].set(
        x.astype(jnp.bfloat16))

    slab = pack_params(params)

    out_padded = pl.pallas_call(
        mlp_kernel,
        out_shape=jax.ShapeDtypeStruct((b_pad, 128), jnp.float32),
        grid=grid,
        in_specs=[
            pl.BlockSpec((tb_eff, _X_PAD), lambda i: (i, 0)),       # streamed x
            pl.BlockSpec((_SLAB_ROWS, 128), lambda i: (0, 0)),      # resident params
        ],
        out_specs=pl.BlockSpec((tb_eff, 128), lambda i: (i, 0)),    # lane-dense out
        compiler_params=pltpu.CompilerParams(
            dimension_semantics=("parallel",),
        ),
    )(x16, slab)

    return out_padded[:B, :3]


def init_params(key):
    """Deterministic synthetic init matching nn.Linear shapes (weights as [in, out])."""
    k1, k2, k3, k4, k5, k6 = jax.random.split(key, 6)

    def lin(kw, kb, fan_in, fan_out):
        bound = 1.0 / jnp.sqrt(fan_in)
        w = jax.random.uniform(kw, (fan_in, fan_out), jnp.float32, -bound, bound)
        b = jax.random.uniform(kb, (fan_out,), jnp.float32, -bound, bound)
        return w, b

    w1, b1 = lin(k1, k2, 10, 64)
    w2, b2 = lin(k3, k4, 64, 32)
    w3, b3 = lin(k5, k6, 32, 3)
    return (w1, b1, w2, b2, w3, b3)


def reference_forward(x, params):
    w1, b1, w2, b2, w3, b3 = params
    h1 = jnp.maximum(x @ w1 + b1, 0.0)
    h2 = jnp.maximum(h1 @ w2 + b2, 0.0)
    return h2 @ w3 + b3


if __name__ == "__main__":
    key = jax.random.PRNGKey(0)
    kx, kp, kx2 = jax.random.split(key, 3)
    params = init_params(kp)

    # Small demo batch (single grid step).
    B = 8
    x = jax.random.normal(kx, (B, 10), jnp.float32)
    out = jax.block_until_ready(ai_fork_brain_forward(x, params))
    ref = reference_forward(x, params)
    assert out.shape == (B, 3)
    # bf16 MXU inputs vs f32 reference -> loosened tolerance.
    assert jnp.allclose(out, ref, atol=3e-2, rtol=3e-2), "mismatch vs. reference (B=8)"

    # Exercise multi-step grid + remainder padding (B not a multiple of the tile).
    B2 = 200
    x2 = jax.random.normal(kx2, (B2, 10), jnp.float32)
    out2 = jax.block_until_ready(ai_fork_brain_forward(x2, params, tb=64))
    ref2 = reference_forward(x2, params)
    assert out2.shape == (B2, 3)
    assert jnp.allclose(out2, ref2, atol=3e-2, rtol=3e-2), "mismatch vs. reference (B=200)"

    print("KERNEL_OK")
</pallas_src>

<mosaic_0001>
module attributes {stable_mosaic.version = 11 : i64} {
  func.func @mlp_kernel(%arg0: i32, %arg1: memref<16x16xbf16, #tpu.memory_space<vmem>>, %arg2: memref<320x128xbf16, #tpu.memory_space<vmem>>, %arg3: memref<16x128xf32, #tpu.memory_space<vmem>>) attributes {dimension_semantics = [#tpu.dimension_semantics<parallel>], iteration_bounds = array<i64: 1>, scalar_prefetch = 0 : i64, scratch_operands = 0 : i64, tpu.core_type = #tpu.core_type<tc>, window_params = [{transform_indices = @transform_0, window_bounds = array<i64: 16, 16>}, {pipeline_mode = #tpu.pipeline_mode<synchronous>, transform_indices = @transform_1, window_bounds = array<i64: 320, 128>}, {transform_indices = @transform_2, window_bounds = array<i64: 16, 128>}]} {
    %c0 = arith.constant 0 : index
    %c0_0 = arith.constant 0 : index
    %0 = vector.load %arg1[%c0, %c0_0] : memref<16x16xbf16, #tpu.memory_space<vmem>>, vector<16x16xbf16>
    %c0_1 = arith.constant 0 : index
    %c0_2 = arith.constant 0 : index
    %1 = vector.load %arg2[%c0_1, %c0_2] : memref<320x128xbf16, #tpu.memory_space<vmem>>, vector<16x128xbf16>
    %c16 = arith.constant 16 : index
    %c0_3 = arith.constant 0 : index
    %2 = vector.load %arg2[%c16, %c0_3] : memref<320x128xbf16, #tpu.memory_space<vmem>>, vector<1x128xbf16>
    %3 = arith.extf %2 : vector<1x128xbf16> to vector<1x128xf32>
    %c32 = arith.constant 32 : index
    %c0_4 = arith.constant 0 : index
    %4 = vector.load %arg2[%c32, %c0_4] : memref<320x128xbf16, #tpu.memory_space<vmem>>, vector<128x128xbf16>
    %c160 = arith.constant 160 : index
    %c0_5 = arith.constant 0 : index
    %5 = vector.load %arg2[%c160, %c0_5] : memref<320x128xbf16, #tpu.memory_space<vmem>>, vector<1x128xbf16>
    %6 = arith.extf %5 : vector<1x128xbf16> to vector<1x128xf32>
    %c176 = arith.constant 176 : index
    %c0_6 = arith.constant 0 : index
    %7 = vector.load %arg2[%c176, %c0_6] : memref<320x128xbf16, #tpu.memory_space<vmem>>, vector<128x128xbf16>
    %c304 = arith.constant 304 : index
    %c0_7 = arith.constant 0 : index
    %8 = vector.load %arg2[%c304, %c0_7] : memref<320x128xbf16, #tpu.memory_space<vmem>>, vector<1x128xbf16>
    %9 = arith.extf %8 : vector<1x128xbf16> to vector<1x128xf32>
    %cst = arith.constant dense<0.000000e+00> : vector<16x128xf32>
    %10 = tpu.matmul %0, %1, %cst {dimension_numbers = #tpu.dot_dimension_numbers<[1], [0], [0], [1], [0, 0, 1, 1], [], []>} : vector<16x16xbf16>, vector<16x128xbf16>, vector<16x128xf32> -> vector<16x128xf32>
    %11 = vector.broadcast %3 : vector<1x128xf32> to vector<16x128xf32>
    %12 = arith.addf %10, %11 : vector<16x128xf32>
    %cst_8 = arith.constant 0.000000e+00 : f32
    %13 = vector.broadcast %cst_8 : f32 to vector<16x128xf32>
    %14 = arith.maximumf %12, %13 : vector<16x128xf32>
    %15 = arith.truncf %14 : vector<16x128xf32> to vector<16x128xbf16>
    %cst_9 = arith.constant dense<0.000000e+00> : vector<16x128xf32>
    %16 = tpu.matmul %15, %4, %cst_9 {dimension_numbers = #tpu.dot_dimension_numbers<[1], [0], [0], [1], [0, 0, 1, 1], [], []>} : vector<16x128xbf16>, vector<128x128xbf16>, vector<16x128xf32> -> vector<16x128xf32>
    %17 = vector.broadcast %6 : vector<1x128xf32> to vector<16x128xf32>
    %18 = arith.addf %16, %17 : vector<16x128xf32>
    %cst_10 = arith.constant 0.000000e+00 : f32
    %19 = vector.broadcast %cst_10 : f32 to vector<16x128xf32>
    %20 = arith.maximumf %18, %19 : vector<16x128xf32>
    %21 = arith.truncf %20 : vector<16x128xf32> to vector<16x128xbf16>
    %cst_11 = arith.constant dense<0.000000e+00> : vector<16x128xf32>
    %22 = tpu.matmul %21, %7, %cst_11 {dimension_numbers = #tpu.dot_dimension_numbers<[1], [0], [0], [1], [0, 0, 1, 1], [], []>} : vector<16x128xbf16>, vector<128x128xbf16>, vector<16x128xf32> -> vector<16x128xf32>
    %23 = vector.broadcast %9 : vector<1x128xf32> to vector<16x128xf32>
    %24 = arith.addf %22, %23 : vector<16x128xf32>
    %c0_12 = arith.constant 0 : index
    %c0_13 = arith.constant 0 : index
    %25 = vector.load %arg3[%c0_12, %c0_13] : memref<16x128xf32, #tpu.memory_space<vmem>>, vector<16x128xf32>
    tpu.vector_store %arg3[%c0_12, %c0_13], %24 {strides = array<i32>} : memref<16x128xf32, #tpu.memory_space<vmem>>, vector<16x128xf32>,
    return
  }
  func.func @transform_0(%arg0: i32) -> (i32, i32) {
    %c0_i32 = arith.constant 0 : i32
    %c0_i32_0 = arith.constant 0 : i32
    return %arg0, %c0_i32 : i32, i32
  }
  func.func @transform_1(%arg0: i32) -> (i32, i32) {
    %c0_i32 = arith.constant 0 : i32
    %c0_i32_0 = arith.constant 0 : i32
    %c0_i32_1 = arith.constant 0 : i32
    return %c0_i32, %c0_i32_0 : i32, i32
  }
  func.func @transform_2(%arg0: i32) -> (i32, i32) {
    %c0_i32 = arith.constant 0 : i32
    %c0_i32_0 = arith.constant 0 : i32
    return %arg0, %c0_i32 : i32, i32
  }
}

</mosaic_0001>

<llo_original>
// kernel: tpu_custom_call.1
$region0: #{tpu_custom_call.1}
  #allocation0 [shape = 'u32[]', space=smem, size = 0x4, offset = 0x4, fixed_abs, tag = 'smem constant byte address 0x4 - core index']
  #allocation1 [shape = 'u32[144,128]{1,0:T(1,128)}', space=vmem, size = 0x12000, scoped, tag = 'internal scratch']
  %s0 = inlined_call_operand.hbm [shape: bf16[16,16], index: 0, kind: input, shape index: {}]
  %s1 = inlined_call_operand.hbm [shape: bf16[320,128], index: 1, kind: input, shape index: {}]
  %s2 = inlined_call_operand.hbm [shape: f32[16,128], index: 2, kind: output, shape index: {}]
  %s3 = sld [smem:[#allocation0]]
  $region26: #{tpu_custom_call.1} parent=0
    _
  %s5 = ssub.s32 1, %s3
  %s6 = scalar_select 0, %s5, %s3
  $region1: #{tpu_custom_call.1} parent=0
    #allocation2 [shape = 'u8[4096]{0}', space=vmem, size = 0x1000, scoped, tag = 'input window, operand 0, single buffered']
    #allocation3 [shape = 's32[1]{0}', space=sflag, size = 0x4, scoped, tag = 'scoped memory for tpu_custom_call.1']
    #allocation4 [shape = 's32[1]{0}', space=sflag, size = 0x4, scoped, tag = 'scoped memory for tpu_custom_call.1']
    #allocation5 [shape = 'u8[81920]{0}', space=vmem, size = 0x14000, scoped, tag = 'input window, operand 1, single buffered']
    #allocation6 [shape = 's32[1]{0}', space=sflag, size = 0x4, scoped, tag = 'scoped memory for tpu_custom_call.1']
    #allocation7 [shape = 'u8[8192]{0}', space=vmem, size = 0x2000, scoped, tag = 'output window, operand 0, single buffered']
    %7 = vsyncpa [#allocation3], 0
    %8 = vsyncpa [#allocation6], 0
    %9 = vsyncpa [#allocation4], 0
    // Predicated region
    $region2: #{tpu_custom_call.1} parent=1 // pred_check
      _
    $region3: #{tpu_custom_call.1} parent=1 // pred_check_branch
      %11 = sbr.rel (0) target = $region5
    $region4: #{tpu_custom_call.1} parent=1 // pred_region
      %s13 = ssub.s32 128, 128
      %14 = vsyncadd [#allocation3], %s13
      %s15 = sshll.u32 [#allocation2], 4
      %s16 = int_to_ptr.vmem [resolvable:$true] %s15
      %21 = dma.hbm_to_vmem [thread:$0]  %s0, 128, %s16, [#allocation3], 64, 64, 4
    $region5: #{tpu_custom_call.1} parent=1 // pred_fallthru
      _
    // Predicated region
    $region6: #{tpu_custom_call.1} parent=1 // pred_check
      _
    $region7: #{tpu_custom_call.1} parent=1 // pred_check_branch
      %23 = sbr.rel (0) target = $region9
    $region8: #{tpu_custom_call.1} parent=1 // pred_region
      %s25 = ssub.s32 2560, 2560
      %26 = vsyncadd [#allocation6], %s25
      %s27 = sshll.u32 [#allocation5], 4
      %s28 = int_to_ptr.vmem [resolvable:$true] %s27
      %33 = dma.hbm_to_vmem [thread:$0]  %s1, 2560, %s28, [#allocation6], 64, 64, 4
    $region9: #{tpu_custom_call.1} parent=1 // pred_fallthru
      _
    // Predicated region
    $region10: #{tpu_custom_call.1} parent=1 // pred_check
      _
    $region11: #{tpu_custom_call.1} parent=1 // pred_check_branch
      %35 = sbr.rel (0) target = $region13
    $region12: #{tpu_custom_call.1} parent=1 // pred_region
      %36 = dma.done [#allocation3], 128
    $region13: #{tpu_custom_call.1} parent=1 // pred_fallthru
      _
    // Predicated region
    $region14: #{tpu_custom_call.1} parent=1 // pred_check
      _
    $region15: #{tpu_custom_call.1} parent=1 // pred_check_branch
      %38 = sbr.rel (0) target = $region17
    $region16: #{tpu_custom_call.1} parent=1 // pred_region
      %39 = dma.done [#allocation6], 2560
    $region17: #{tpu_custom_call.1} parent=1 // pred_fallthru
      _
    %v41 = vld [vmem:[#allocation2] sm:$0xf]
    %v42 = vld [vmem:[#allocation2 + $0x4] sm:$0xf]
    %v43 = vld [vmem:[#allocation5] sm:$0xf]
    %v44 = vld [vmem:[#allocation5 + $0x4] sm:$0xf]
    %v45 = vld [vmem:[#allocation5 + $0x8] sm:$0x1]
    %v46 = vunpack.c.l.bf16 %v45
    %v47 = vld [vmem:[#allocation5 + $0x10] sm:$0xf]
    %v48 = vld [vmem:[#allocation5 + $0x14] sm:$0xf]
    %v49 = vld [vmem:[#allocation5 + $0x18] sm:$0xf]
    %v50 = vld [vmem:[#allocation5 + $0x1c] sm:$0xf]
    %v51 = vld [vmem:[#allocation5 + $0x20] sm:$0xf]
    %v52 = vld [vmem:[#allocation5 + $0x24] sm:$0xf]
    %v53 = vld [vmem:[#allocation5 + $0x28] sm:$0xf]
    %v54 = vld [vmem:[#allocation5 + $0x2c] sm:$0xf]
    %v55 = vld [vmem:[#allocation5 + $0x30] sm:$0xf]
    %v56 = vld [vmem:[#allocation5 + $0x34] sm:$0xf]
    %v57 = vld [vmem:[#allocation5 + $0x38] sm:$0xf]
    %v58 = vld [vmem:[#allocation5 + $0x3c] sm:$0xf]
    %v59 = vld [vmem:[#allocation5 + $0x40] sm:$0xf]
    %v60 = vld [vmem:[#allocation5 + $0x44] sm:$0xf]
    %v61 = vld [vmem:[#allocation5 + $0x48] sm:$0xf]
    %v62 = vld [vmem:[#allocation5 + $0x4c] sm:$0xf]
    %v63 = vld [vmem:[#allocation5 + $0x50] sm:$0x1]
    %v64 = vunpack.c.l.bf16 %v63
    %v65 = vld [vmem:[#allocation5 + $0x58] sm:$0xf]
    %v66 = vld [vmem:[#allocation5 + $0x5c] sm:$0xf]
    %v67 = vld [vmem:[#allocation5 + $0x60] sm:$0xf]
    %v68 = vld [vmem:[#allocation5 + $0x64] sm:$0xf]
    %v69 = vld [vmem:[#allocation5 + $0x68] sm:$0xf]
    %v70 = vld [vmem:[#allocation5 + $0x6c] sm:$0xf]
    %v71 = vld [vmem:[#allocation5 + $0x70] sm:$0xf]
    %v72 = vld [vmem:[#allocation5 + $0x74] sm:$0xf]
    %v73 = vld [vmem:[#allocation5 + $0x78] sm:$0xf]
    %v74 = vld [vmem:[#allocation5 + $0x7c] sm:$0xf]
    %v75 = vld [vmem:[#allocation5 + $0x80] sm:$0xf]
    %v76 = vld [vmem:[#allocation5 + $0x84] sm:$0xf]
    %v77 = vld [vmem:[#allocation5 + $0x88] sm:$0xf]
    %v78 = vld [vmem:[#allocation5 + $0x8c] sm:$0xf]
    %v79 = vld [vmem:[#allocation5 + $0x90] sm:$0xf]
    %v80 = vld [vmem:[#allocation5 + $0x94] sm:$0xf]
    %v81 = vld [vmem:[#allocation5 + $0x98] sm:$0x1]
    %v82 = vunpack.c.l.bf16 %v81
    %v83 = vlaneseq
    %v84 = vshrl.u32 %v83, 7
    %v85 = vsub.s32 0, %v84
    %v86 = vrot.slane %v46, %v85
    %v89 = vunpack.c.l.b16 %v41
    %v90 = vunpack.c.l.b16 %v42
    %v91 = vpack.c.b16 %v90, %v89
    %v94 = vunpack.c.l.b16 %v43
    %v95 = vunpack.c.l.b16 %v44
    %v96 = vpack.c.b16 %v95, %v94
    %vm98 = vcmask 130048
    %v100 = vsel %vm98, %v91, 0
    %102 = vmatprep.subr.bf16.mxu0 0
    %103 = vmatpush1.bf16.msra.mxu0 %v96
    %104 = vmatprep.subr.bf16.mxu0 0
    %105 = vmatpush1.bf16.msra.mxu0 0
    %106 = vmatprep.subr.bf16.mxu0 0
    %107 = vmatpush1.bf16.msra.mxu0 0
    %108 = vmatprep.subr.bf16.mxu0 0
    %109 = vmatpush1.bf16.msra.mxu0 0
    %110 = vmatprep.subr.bf16.mxu0 0
    %111 = vmatpush1.bf16.msra.mxu0 0
    %112 = vmatprep.subr.bf16.mxu0 0
    %113 = vmatpush1.bf16.msra.mxu0 0
    %114 = vmatprep.subr.bf16.mxu0 0
    %115 = vmatpush1.bf16.msra.mxu0 0
    %116 = vmatprep.subr.bf16.mxu0 0
    %117 = vmatpush1.bf16.msra.mxu0 0
    %118 = vmatprep.subr.bf16.mxu0 0
    %119 = vmatpush1.bf16.msra.mxu0 0
    %120 = vmatprep.subr.bf16.mxu0 0
    %121 = vmatpush1.bf16.msra.mxu0 0
    %122 = vmatprep.subr.bf16.mxu0 0
    %123 = vmatpush1.bf16.msra.mxu0 0
    %124 = vmatprep.subr.bf16.mxu0 0
    %125 = vmatpush1.bf16.msra.mxu0 0
    %126 = vmatprep.subr.bf16.mxu0 0
    %127 = vmatpush1.bf16.msra.mxu0 0
    %128 = vmatprep.subr.bf16.mxu0 0
    %129 = vmatpush1.bf16.msra.mxu0 0
    %130 = vmatprep.subr.bf16.mxu0 0
    %131 = vmatpush1.bf16.msra.mxu0 0
    %132 = vmatprep.subr.bf16.mxu0 0
    %133 = vmatpush1.bf16.msra.mxu0 0
    %134 = vmatprep.mubr.bf16.mxu0 0
    %135 = vmatmul.mubr.bf16.gmra.mrb[0].mxu0 %v100
    %v136 = vpop.f32.mrb[0].mxu0
    %v137 = vadd.f32 %v86, %v136
    %v138 = vpop.f32.mrb[0].mxu0
    %v139 = vpop.f32.mrb[0].mxu0
    %v140 = vadd.f32 %v86, %v139
    %v141 = vpop.f32.mrb[0].mxu0
    %142 = vdwg.mxu0
    %v143 = vmax.f32 %v137, 0.0
    %v144 = vmax.f32 %v140, 0.0
    %v145 = vpack.c.bf16 %v144, %v143
    %v146 = vlaneseq
    %v147 = vshrl.u32 %v146, 7
    %v148 = vsub.s32 0, %v147
    %v149 = vrot.slane %v64, %v148
    %v166 = vunpack.c.l.b16 %v47
    %v167 = vunpack.c.l.b16 %v48
    %v168 = vunpack.c.l.b16 %v49
    %v169 = vunpack.c.l.b16 %v50
    %v170 = vunpack.c.l.b16 %v51
    %v171 = vunpack.c.l.b16 %v52
    %v172 = vunpack.c.l.b16 %v53
    %v173 = vunpack.c.l.b16 %v54
    %v174 = vunpack.c.l.b16 %v55
    %v175 = vunpack.c.l.b16 %v56
    %v176 = vunpack.c.l.b16 %v57
    %v177 = vunpack.c.l.b16 %v58
    %v178 = vunpack.c.l.b16 %v59
    %v179 = vunpack.c.l.b16 %v60
    %v180 = vunpack.c.l.b16 %v61
    %v181 = vunpack.c.l.b16 %v62
    %v182 = vpack.c.b16 %v167, %v166
    %v183 = vpack.c.b16 %v169, %v168
    %v184 = vpack.c.b16 %v171, %v170
    %v185 = vpack.c.b16 %v173, %v172
    %v186 = vpack.c.b16 %v175, %v174
    %v187 = vpack.c.b16 %v177, %v176
    %v188 = vpack.c.b16 %v179, %v178
    %v189 = vpack.c.b16 %v181, %v180
    %198 = vmatprep.subr.bf16.mxu0 0
    %199 = vmatpush1.bf16.msra.mxu0 %v182
    %200 = vmatprep.subr.bf16.mxu0 0
    %201 = vmatpush1.bf16.msra.mxu0 %v183
    %202 = vmatprep.subr.bf16.mxu0 0
    %203 = vmatpush1.bf16.msra.mxu0 %v184
    %204 = vmatprep.subr.bf16.mxu0 0
    %205 = vmatpush1.bf16.msra.mxu0 %v185
    %206 = vmatprep.subr.bf16.mxu0 0
    %207 = vmatpush1.bf16.msra.mxu0 %v186
    %208 = vmatprep.subr.bf16.mxu0 0
    %209 = vmatpush1.bf16.msra.mxu0 %v187
    %210 = vmatprep.subr.bf16.mxu0 0
    %211 = vmatpush1.bf16.msra.mxu0 %v188
    %212 = vmatprep.subr.bf16.mxu0 0
    %213 = vmatpush1.bf16.msra.mxu0 %v189
    %214 = vmatprep.subr.bf16.mxu0 0
    %215 = vmatpush1.bf16.msra.mxu0 0
    %216 = vmatprep.subr.bf16.mxu0 0
    %217 = vmatpush1.bf16.msra.mxu0 0
    %218 = vmatprep.subr.bf16.mxu0 0
    %219 = vmatpush1.bf16.msra.mxu0 0
    %220 = vmatprep.subr.bf16.mxu0 0
    %221 = vmatpush1.bf16.msra.mxu0 0
    %222 = vmatprep.subr.bf16.mxu0 0
    %223 = vmatpush1.bf16.msra.mxu0 0
    %224 = vmatprep.subr.bf16.mxu0 0
    %225 = vmatpush1.bf16.msra.mxu0 0
    %226 = vmatprep.subr.bf16.mxu0 0
    %227 = vmatpush1.bf16.msra.mxu0 0
    %228 = vmatprep.subr.bf16.mxu0 0
    %229 = vmatpush1.bf16.msra.mxu0 0
    %230 = vmatprep.mubr.bf16.mxu0 0
    %231 = vmatmul.mubr.bf16.gmra.mrb[0].mxu0 %v145
    %v232 = vpop.f32.mrb[0].mxu0
    %v233 = vadd.f32 %v149, %v232
    %v234 = vpop.f32.mrb[0].mxu0
    %v235 = vpop.f32.mrb[0].mxu0
    %v236 = vadd.f32 %v149, %v235
    %v237 = vpop.f32.mrb[0].mxu0
    %238 = vdwg.mxu0
    %v239 = vmax.f32 %v233, 0.0
    %v240 = vmax.f32 %v236, 0.0
    %v241 = vpack.c.bf16 %v240, %v239
    %v242 = vlaneseq
    %v243 = vshrl.u32 %v242, 7
    %v244 = vsub.s32 0, %v243
    %v245 = vrot.slane %v82, %v244
    %v262 = vunpack.c.l.b16 %v65
    %v263 = vunpack.c.l.b16 %v66
    %v264 = vunpack.c.l.b16 %v67
    %v265 = vunpack.c.l.b16 %v68
    %v266 = vunpack.c.l.b16 %v69
    %v267 = vunpack.c.l.b16 %v70
    %v268 = vunpack.c.l.b16 %v71
    %v269 = vunpack.c.l.b16 %v72
    %v270 = vunpack.c.l.b16 %v73
    %v271 = vunpack.c.l.b16 %v74
    %v272 = vunpack.c.l.b16 %v75
    %v273 = vunpack.c.l.b16 %v76
    %v274 = vunpack.c.l.b16 %v77
    %v275 = vunpack.c.l.b16 %v78
    %v276 = vunpack.c.l.b16 %v79
    %v277 = vunpack.c.l.b16 %v80
    %v278 = vpack.c.b16 %v263, %v262
    %v279 = vpack.c.b16 %v265, %v264
    %v280 = vpack.c.b16 %v267, %v266
    %v281 = vpack.c.b16 %v269, %v268
    %v282 = vpack.c.b16 %v271, %v270
    %v283 = vpack.c.b16 %v273, %v272
    %v284 = vpack.c.b16 %v275, %v274
    %v285 = vpack.c.b16 %v277, %v276
    %294 = vmatprep.subr.bf16.mxu0 0
    %295 = vmatpush1.bf16.msra.mxu0 %v278
    %296 = vmatprep.subr.bf16.mxu0 0
    %297 = vmatpush1.bf16.msra.mxu0 %v279
    %298 = vmatprep.subr.bf16.mxu0 0
    %299 = vmatpush1.bf16.msra.mxu0 %v280
    %300 = vmatprep.subr.bf16.mxu0 0
    %301 = vmatpush1.bf16.msra.mxu0 %v281
    %302 = vmatprep.subr.bf16.mxu0 0
    %303 = vmatpush1.bf16.msra.mxu0 %v282
    %304 = vmatprep.subr.bf16.mxu0 0
    %305 = vmatpush1.bf16.msra.mxu0 %v283
    %306 = vmatprep.subr.bf16.mxu0 0
    %307 = vmatpush1.bf16.msra.mxu0 %v284
    %308 = vmatprep.subr.bf16.mxu0 0
    %309 = vmatpush1.bf16.msra.mxu0 %v285
    %310 = vmatprep.subr.bf16.mxu0 0
    %311 = vmatpush1.bf16.msra.mxu0 0
    %312 = vmatprep.subr.bf16.mxu0 0
    %313 = vmatpush1.bf16.msra.mxu0 0
    %314 = vmatprep.subr.bf16.mxu0 0
    %315 = vmatpush1.bf16.msra.mxu0 0
    %316 = vmatprep.subr.bf16.mxu0 0
    %317 = vmatpush1.bf16.msra.mxu0 0
    %318 = vmatprep.subr.bf16.mxu0 0
    %319 = vmatpush1.bf16.msra.mxu0 0
    %320 = vmatprep.subr.bf16.mxu0 0
    %321 = vmatpush1.bf16.msra.mxu0 0
    %322 = vmatprep.subr.bf16.mxu0 0
    %323 = vmatpush1.bf16.msra.mxu0 0
    %324 = vmatprep.subr.bf16.mxu0 0
    %325 = vmatpush1.bf16.msra.mxu0 0
    %326 = vmatprep.mubr.bf16.mxu0 0
    %327 = vmatmul.mubr.bf16.gmra.mrb[0].mxu0 %v241
    %v328 = vpop.f32.mrb[0].mxu0
    %v329 = vadd.f32 %v245, %v328
    %v330 = vpop.f32.mrb[0].mxu0
    %v331 = vpop.f32.mrb[0].mxu0
    %v332 = vadd.f32 %v245, %v331
    %v333 = vpop.f32.mrb[0].mxu0
    %334 = vdwg.mxu0
    %335 = vst [vmem:[#allocation7] sm:$0xff] %v329
    %336 = vst [vmem:[#allocation7 + $0x8] sm:$0xff] %v332
    // Predicated region
    $region18: #{tpu_custom_call.1} parent=1 // pred_check
      _
    $region19: #{tpu_custom_call.1} parent=1 // pred_check_branch
      %338 = sbr.rel (0) target = $region21
    $region20: #{tpu_custom_call.1} parent=1 // pred_region
      %s340 = ssub.s32 256, 256
      %341 = vsyncadd [#allocation4], %s340
      %s342 = sshll.u32 [#allocation7], 4
      %s343 = int_to_ptr.vmem [resolvable:$true] %s342
      %348 = dma.vmem_to_hbm [thread:$0]  %s343, 256, %s2, [#allocation4], 128, 128, 8
    $region21: #{tpu_custom_call.1} parent=1 // pred_fallthru
      _
    // Predicated region
    $region22: #{tpu_custom_call.1} parent=1 // pred_check
      _
    $region23: #{tpu_custom_call.1} parent=1 // pred_check_branch
      %350 = sbr.rel (0) target = $region25
    $region24: #{tpu_custom_call.1} parent=1 // pred_region
      %351 = dma.done [#allocation4], 256
    $region25: #{tpu_custom_call.1} parent=1 // pred_fallthru
      _
    %352 = vsyncpa [#allocation3], 1
    %353 = vsyncpa [#allocation6], 1
    %354 = vsyncpa [#allocation4], 1

</llo_original>
